<compile_context>
chip_gen: v7x
topology: tpu7x:2x2x1
jax: 0.10.0
libtpu: 0.0.40
codegen_flags: <defaults>
</compile_context>

<pallas_src>
import functools

import jax
import jax.numpy as jnp
from jax.experimental import pallas as pl
from jax.experimental.pallas import tpu as pltpu


_MAX_ROW_TILE = 512


def _vmem_config():
    """Generation-gated VMEM limit / tile budget."""
    cap = None
    try:
        info = pltpu.get_tpu_info()
        cap = int(getattr(info, "vmem_capacity_bytes", 0)) or None
    except Exception:
        cap = None
    if cap is None:
        cap = 64 * 1024 * 1024          # v7x per-TC VMEM; safe everywhere
    limit = (cap * 3) // 4              # 96 MiB on 128 MiB parts, 48 MiB on v7x
    budget = (limit * 2) // 3           # 64 MiB / 32 MiB tile budget
    return limit, budget


_VMEM_LIMIT_BYTES, _TILE_VMEM_BUDGET = _vmem_config()


def _choose_row_tile(bc, hw, itemsize, tile_budget):
    """Row tile: fits the VMEM budget, and gives enough grid steps to pipeline."""
    if bc <= 8:
        # Single block whose dims equal the full array dims (legal block shape).
        return int(bc)

    hw_pad = ((hw + 127) // 128) * 128  # lane padding inside VMEM buffers
    # Per row: double-buffered input tile + double-buffered softmax output tile
    # (x.dtype) plus ~4 live f32 (tr, HW) intermediates inside the body.
    per_row = hw_pad * (4 * itemsize + 4 * 4)
    fixed = 2 * 2 * hw_pad * 4          # double-buffered (2, HW) meshgrid input

    tr = max(8, ((max(tile_budget - fixed, 0) // max(per_row, 1)) // 8) * 8)
    tr = min(tr, _MAX_ROW_TILE)

    # Step-count preference: >= 8 steps of >= 64 rows when BC allows (>= 4
    # steps per TensorCore on v7x), else >= 2 steps of >= 64 rows, else
    # >= 2 steps of >= 8 rows so double-buffering can hide HBM latency.
    if bc >= 8 * 64:
        cap = max(64, (bc // 64) * 8)
    elif bc >= 2 * 64:
        cap = max(64, (bc // 16) * 8)
    else:
        cap = max(8, (bc // 16) * 8)
    tr = min(tr, cap, (bc // 8) * 8)

    # TODO(synk): for very large H*W (>= ~128K elements) even an 8-row tile of
    # f32 intermediates can exceed v7x's VMEM; a lane-blocked online-softmax
    # (two-pass) variant is needed there.
    return int(max(tr, 8))


def _spatial_kernel(x_ref, pos_ref, sm_ref, coord_ref):
    # x_ref: (tr, HW) tile of flattened logits (logical width HW; Mosaic masks
    # the physical lane padding for the max/sum reductions).
    x = x_ref[...].astype(jnp.float32)

    # Numerically stable softmax along lanes.
    m = jnp.max(x, axis=-1, keepdims=True)
    e = jnp.exp(x - m)
    s = jnp.sum(e, axis=-1, keepdims=True)
    inv = pl.reciprocal(s, approx=False)            # keep 1e-5 tolerance
    p = e * inv

    # Lane-dense softmax-map store.
    sm_ref[...] = p.astype(sm_ref.dtype)

    # Expected (x, y) coordinates: VPU multiplies + XLU lane reductions against
    # the VMEM-resident normalized meshgrid rows (pos_x, pos_y).
    px = pos_ref[0:1, :]                             # (1, HW), sublane-broadcast
    py = pos_ref[1:2, :]
    ex = jnp.sum(p * px, axis=-1, keepdims=True)     # (tr, 1)
    ey = jnp.sum(p * py, axis=-1, keepdims=True)
    coord_ref[...] = jnp.concatenate([ex, ey], axis=-1).astype(coord_ref.dtype)


@functools.partial(jax.jit, static_argnames=("row_tile",))
def spatial_coordinates_expectation(x, row_tile=None):
    """x: (B, C, H, W) float. Returns (softmax_map (B,C,H,W), coords (B,C,2))."""
    B, C, H, W = x.shape
    HW = H * W
    BC = B * C

    x_flat = x.reshape(BC, HW)                       # free metadata reshape

    # kornia.create_meshgrid(normalized_coordinates=True):
    #   xs = linspace(-1, 1, W) varies along width, ys = linspace(-1, 1, H)
    #   varies along height; flattened row-major over (H, W).
    xs = jnp.linspace(-1.0, 1.0, W, dtype=jnp.float32)
    ys = jnp.linspace(-1.0, 1.0, H, dtype=jnp.float32)
    pos = jnp.stack([jnp.tile(xs, (H,)), jnp.repeat(ys, W)], axis=0)  # (2, HW)

    itemsize = jnp.dtype(x.dtype).itemsize
    tr = row_tile if row_tile is not None else _choose_row_tile(
        BC, HW, itemsize, _TILE_VMEM_BUDGET)

    grid = (pl.cdiv(BC, tr),)

    cost = pl.CostEstimate(
        flops=int(8 * BC * HW),
        transcendentals=int(BC * HW),
        bytes_accessed=int(2 * BC * HW * itemsize + 2 * BC * itemsize + 8 * HW),
    )

    sm_flat, coord_flat = pl.pallas_call(
        _spatial_kernel,
        out_shape=(
            jax.ShapeDtypeStruct((BC, HW), x.dtype),
            jax.ShapeDtypeStruct((BC, 2), x.dtype),
        ),
        grid_spec=pltpu.PrefetchScalarGridSpec(
            num_scalar_prefetch=0,
            grid=grid,
            in_specs=[
                pl.BlockSpec((tr, HW), lambda i: (i, 0)),
                pl.BlockSpec((2, HW), lambda i: (0, 0)),   # fetched once
            ],
            out_specs=[
                pl.BlockSpec((tr, HW), lambda i: (i, 0)),
                pl.BlockSpec((tr, 2), lambda i: (i, 0)),
            ],
        ),
        compiler_params=pltpu.CompilerParams(
            dimension_semantics=("parallel",),
            vmem_limit_bytes=_VMEM_LIMIT_BYTES,
        ),
        cost_estimate=cost,
    )(x_flat, pos)

    sm = sm_flat.reshape(B, C, H, W)
    coords = coord_flat.reshape(B, C, 2)
    return sm, coords


def _reference(x):
    """Pure-JAX reference reproducing kornia semantics."""
    B, C, H, W = x.shape
    HW = H * W
    xf = x.reshape(B, C, HW).astype(jnp.float32)
    p = jax.nn.softmax(xf, axis=-1)
    xs = jnp.linspace(-1.0, 1.0, W, dtype=jnp.float32)
    ys = jnp.linspace(-1.0, 1.0, H, dtype=jnp.float32)
    pos_x = jnp.tile(xs, (H,))
    pos_y = jnp.repeat(ys, W)
    ex = jnp.sum(p * pos_x, axis=-1)
    ey = jnp.sum(p * pos_y, axis=-1)
    return (
        p.reshape(B, C, H, W).astype(x.dtype),
        jnp.stack([ex, ey], axis=-1).astype(x.dtype),
    )


if __name__ == "__main__":
    # Case 1: lane dim already a multiple of 128.
    B, C, H, W = 2, 4, 16, 16
    x = jax.random.normal(jax.random.PRNGKey(0), (B, C, H, W), dtype=jnp.float32)
    sm, coords = spatial_coordinates_expectation(x)
    sm = jax.block_until_ready(sm)
    coords = jax.block_until_ready(coords)
    sm_ref, coords_ref = _reference(x)
    assert sm.shape == (B, C, H, W) and coords.shape == (B, C, 2)
    assert jnp.allclose(sm, sm_ref, atol=1e-5, rtol=1e-5)
    assert jnp.allclose(coords, coords_ref, atol=1e-5, rtol=1e-5)

    # Case 2: non-128-multiple spatial size, BC < 8 (single full-dim block).
    B2, C2, H2, W2 = 2, 3, 12, 10
    x2 = jax.random.normal(jax.random.PRNGKey(1), (B2, C2, H2, W2), dtype=jnp.float32)
    sm2, coords2 = spatial_coordinates_expectation(x2)
    sm2 = jax.block_until_ready(sm2)
    coords2 = jax.block_until_ready(coords2)
    sm2_ref, coords2_ref = _reference(x2)
    assert sm2.shape == (B2, C2, H2, W2) and coords2.shape == (B2, C2, 2)
    assert jnp.allclose(sm2, sm2_ref, atol=1e-5, rtol=1e-5)
    assert jnp.allclose(coords2, coords2_ref, atol=1e-5, rtol=1e-5)

    # Case 3: multi-step grid with a ragged last row block and ragged lanes.
    B3, C3, H3, W3 = 3, 5, 9, 11
    x3 = jax.random.normal(jax.random.PRNGKey(2), (B3, C3, H3, W3), dtype=jnp.float32)
    sm3, coords3 = spatial_coordinates_expectation(x3)
    sm3 = jax.block_until_ready(sm3)
    coords3 = jax.block_until_ready(coords3)
    sm3_ref, coords3_ref = _reference(x3)
    assert sm3.shape == (B3, C3, H3, W3) and coords3.shape == (B3, C3, 2)
    assert jnp.allclose(sm3, sm3_ref, atol=1e-5, rtol=1e-5)
    assert jnp.allclose(coords3, coords3_ref, atol=1e-5, rtol=1e-5)

    print("KERNEL_OK")
</pallas_src>

<mosaic_0001>
module attributes {stable_mosaic.version = 11 : i64} {
  func.func @_spatial_kernel(%arg0: i32, %arg1: memref<8x256xf32, #tpu.memory_space<vmem>>, %arg2: memref<2x256xf32, #tpu.memory_space<vmem>>, %arg3: memref<8x256xf32, #tpu.memory_space<vmem>>, %arg4: memref<8x2xf32, #tpu.memory_space<vmem>>) attributes {dimension_semantics = [#tpu.dimension_semantics<parallel>], iteration_bounds = array<i64: 1>, scalar_prefetch = 0 : i64, scratch_operands = 0 : i64, tpu.core_type = #tpu.core_type<tc>, window_params = [{transform_indices = @transform_0, window_bounds = array<i64: 8, 256>}, {pipeline_mode = #tpu.pipeline_mode<synchronous>, transform_indices = @transform_1, window_bounds = array<i64: 2, 256>}, {transform_indices = @transform_2, window_bounds = array<i64: 8, 256>}, {transform_indices = @transform_3, window_bounds = array<i64: 8, 2>}]} {
    %c0 = arith.constant 0 : index
    %c0_0 = arith.constant 0 : index
    %0 = vector.load %arg1[%c0, %c0_0] : memref<8x256xf32, #tpu.memory_space<vmem>>, vector<8x256xf32>
    %cst = arith.constant dense<0xFF800000> : vector<8xf32>
    %1 = vector.multi_reduction <maximumf>, %0, %cst [1] : vector<8x256xf32> to vector<8xf32>
    %2 = vector.shape_cast %1 : vector<8xf32> to vector<8x1xf32>
    %3 = vector.broadcast %2 : vector<8x1xf32> to vector<8x256xf32>
    %4 = arith.subf %0, %3 : vector<8x256xf32>
    %5 = math.exp %4 : vector<8x256xf32>
    %cst_1 = arith.constant dense<0.000000e+00> : vector<8xf32>
    %6 = vector.multi_reduction <add>, %5, %cst_1 [1] : vector<8x256xf32> to vector<8xf32>
    %7 = vector.shape_cast %6 : vector<8xf32> to vector<8x1xf32>
    %8 = tpu.reciprocal %7 : vector<8x1xf32> -> vector<8x1xf32>
    %9 = vector.broadcast %8 : vector<8x1xf32> to vector<8x256xf32>
    %10 = arith.mulf %5, %9 : vector<8x256xf32>
    %c0_2 = arith.constant 0 : index
    %c0_3 = arith.constant 0 : index
    %11 = vector.load %arg3[%c0_2, %c0_3] : memref<8x256xf32, #tpu.memory_space<vmem>>, vector<8x256xf32>
    tpu.vector_store %arg3[%c0_2, %c0_3], %10 {strides = array<i32>} : memref<8x256xf32, #tpu.memory_space<vmem>>, vector<8x256xf32>,
    %c0_4 = arith.constant 0 : index
    %c0_5 = arith.constant 0 : index
    %12 = vector.load %arg2[%c0_4, %c0_5] : memref<2x256xf32, #tpu.memory_space<vmem>>, vector<1x256xf32>
    %c1 = arith.constant 1 : index
    %c0_6 = arith.constant 0 : index
    %13 = vector.load %arg2[%c1, %c0_6] : memref<2x256xf32, #tpu.memory_space<vmem>>, vector<1x256xf32>
    %14 = vector.broadcast %12 : vector<1x256xf32> to vector<8x256xf32>
    %15 = arith.mulf %10, %14 : vector<8x256xf32>
    %cst_7 = arith.constant dense<0.000000e+00> : vector<8xf32>
    %16 = vector.multi_reduction <add>, %15, %cst_7 [1] : vector<8x256xf32> to vector<8xf32>
    %17 = vector.shape_cast %16 : vector<8xf32> to vector<8x1xf32>
    %18 = vector.broadcast %13 : vector<1x256xf32> to vector<8x256xf32>
    %19 = arith.mulf %10, %18 : vector<8x256xf32>
    %cst_8 = arith.constant dense<0.000000e+00> : vector<8xf32>
    %20 = vector.multi_reduction <add>, %19, %cst_8 [1] : vector<8x256xf32> to vector<8xf32>
    %21 = vector.shape_cast %20 : vector<8xf32> to vector<8x1xf32>
    %22 = tpu.concatenate %17, %21 in 1 : vector<8x1xf32>, vector<8x1xf32> -> vector<8x2xf32>
    %c0_9 = arith.constant 0 : index
    %c0_10 = arith.constant 0 : index
    %23 = vector.load %arg4[%c0_9, %c0_10] : memref<8x2xf32, #tpu.memory_space<vmem>>, vector<8x2xf32>
    tpu.vector_store %arg4[%c0_9, %c0_10], %22 {strides = array<i32>} : memref<8x2xf32, #tpu.memory_space<vmem>>, vector<8x2xf32>,
    return
  }
  func.func @transform_0(%arg0: i32) -> (i32, i32) {
    %c0_i32 = arith.constant 0 : i32
    %c0_i32_0 = arith.constant 0 : i32
    return %arg0, %c0_i32 : i32, i32
  }
  func.func @transform_1(%arg0: i32) -> (i32, i32) {
    %c0_i32 = arith.constant 0 : i32
    %c0_i32_0 = arith.constant 0 : i32
    %c0_i32_1 = arith.constant 0 : i32
    return %c0_i32, %c0_i32_0 : i32, i32
  }
  func.func @transform_2(%arg0: i32) -> (i32, i32) {
    %c0_i32 = arith.constant 0 : i32
    %c0_i32_0 = arith.constant 0 : i32
    return %arg0, %c0_i32 : i32, i32
  }
  func.func @transform_3(%arg0: i32) -> (i32, i32) {
    %c0_i32 = arith.constant 0 : i32
    %c0_i32_0 = arith.constant 0 : i32
    return %arg0, %c0_i32 : i32, i32
  }
}

</mosaic_0001>

<llo_original>
// kernel: tile.8
$region0: #{tile.8}
  #allocation0 [shape = 's32[1]{0}', space=sflag, size = 0x4, scoped, tag = 'scoped memory for tile.8']
  %s0 = inlined_call_operand.vmem [shape: f32[16], index: 0, kind: input, shape index: {}]
  %s1 = inlined_call_operand.vmem [shape: f32[16,16], index: 1, kind: output, shape index: {}]
  // Predicated region
  $region2: #{tile.8} parent=0 // pred_check
    _
  $region3: #{tile.8} parent=0 // pred_check_branch
    %3 = sbr.rel (0) target = $region5
  $region4: #{tile.8} parent=0 // pred_region
    _
  $region5: #{tile.8} parent=0 // pred_fallthru
    _
  %v4 = vld [vmem:[%s0] ss:$0 sm:$0xff]
  %5 = vst [vmem:[%s1] sm:$0xff] %v4
  %s6 = scalar_lea.vmem %s1, 8
  %7 = vst [vmem:[%s6] sm:$0xff] %v4

// kernel: spatial_coordinates_expectation.1
$region0: #{spatial_coordinates_expectation.1}
  #allocation0 [shape = 'u32[]', space=smem, size = 0x4, offset = 0x4, fixed_abs, tag = 'smem constant byte address 0x4 - core index']
  #allocation1 [shape = 'u32[144,128]{1,0:T(1,128)}', space=vmem, size = 0x12000, scoped, tag = 'internal scratch']
  %s0 = inlined_call_operand.vmem [shape: f32[8,256], index: 0, kind: input, shape index: {}]
  %s1 = inlined_call_operand.vmem [shape: f32[2,256], index: 1, kind: input, shape index: {}]
  %s2 = inlined_call_operand.vmem [shape: f32[8,256], index: 2, kind: output, shape index: {0}]
  %s3 = inlined_call_operand.vmem [shape: f32[8,2], index: 3, kind: output, shape index: {1}]
  %4 = xla_tuple %s2, %s3
  %s5 = sld [smem:[#allocation0]]
  $region26: #{spatial_coordinates_expectation.1} parent=0
    _
  %s7 = ssub.s32 1, %s5
  %s8 = scalar_select 0, %s7, %s5
  // Predicated region
  $region2: #{spatial_coordinates_expectation.1} parent=0 // pred_check
    _
  $region3: #{spatial_coordinates_expectation.1} parent=0 // pred_check_branch
    %10 = sbr.rel (0) target = $region5
  $region4: #{spatial_coordinates_expectation.1} parent=0 // pred_region
    _
  $region5: #{spatial_coordinates_expectation.1} parent=0 // pred_fallthru
    _
  // Predicated region
  $region6: #{spatial_coordinates_expectation.1} parent=0 // pred_check
    _
  $region7: #{spatial_coordinates_expectation.1} parent=0 // pred_check_branch
    %12 = sbr.rel (0) target = $region9
  $region8: #{spatial_coordinates_expectation.1} parent=0 // pred_region
    _
  $region9: #{spatial_coordinates_expectation.1} parent=0 // pred_fallthru
    _
  %v13 = vld [vmem:[%s0] sm:$0xff]
  %v14 = vld [vmem:[%s0 + $0x8] sm:$0xff]
  %v15 = vmax.f32 %v13, %v14
  %16 = vmax.xlane.f32.xlu0 %v15
  %v17 = vpop.xlane.xlu0 %16
  %v18 = vsub.f32 %v13, %v17
  %v19 = vsub.f32 %v14, %v17
  %v20 = vmul.f32 %v18, 1.442695
  %v21 = vpow.pop %v20
  %v22 = vmul.f32 %v19, 1.442695
  %v23 = vpow.pop %v22
  %v24 = vadd.f32 %v21, %v23
  %25 = vadd.xlane.f32.xlu0 %v24
  %v26 = vpop.xlane.xlu0 %25
  %v27 = vrcp.pop %v26
  %v28 = vmul.f32 %v21, %v27
  %v29 = vmul.f32 %v23, %v27
  %30 = vst [vmem:[%s2] sm:$0xff] %v28
  %31 = vst [vmem:[%s2 + $0x8] sm:$0xff] %v29
  %v32 = vld [vmem:[%s1] ss:$2 sm:$0x3]
  %s33 = scalar_lea.vmem %s1, 1
  %v34 = vld [vmem:[%s33] ss:$2 sm:$0x3]
  %v36 = vlaneseq
  %v37 = vshrl.u32 %v36, 7
  %v38 = vsub.s32 0, %v37
  %v39 = vrot.slane %v32, %v38
  %v40 = vlaneseq
  %v41 = vshrl.u32 %v40, 7
  %v42 = vsub.s32 1, %v41
  %v43 = vrot.slane %v32, %v42
  %v46 = vmul.f32 %v28, %v39
  %v47 = vmul.f32 %v29, %v43
  %v48 = vadd.f32 %v46, %v47
  %49 = vadd.xlane.f32.xlu0 %v48
  %v50 = vpop.xlane.xlu0 %49
  %v52 = vlaneseq
  %v53 = vshrl.u32 %v52, 7
  %v54 = vsub.s32 0, %v53
  %v55 = vrot.slane %v34, %v54
  %v56 = vlaneseq
  %v57 = vshrl.u32 %v56, 7
  %v58 = vsub.s32 1, %v57
  %v59 = vrot.slane %v34, %v58
  %v62 = vmul.f32 %v28, %v55
  %v63 = vmul.f32 %v29, %v59
  %v64 = vadd.f32 %v62, %v63
  %65 = vadd.xlane.f32.xlu0 %v64
  %v66 = vpop.xlane.xlu0 %65
  %vm67 = vcmask 7168
  %v68 = vsel %vm67, %v50, %v66
  %vm69 = vcmask 15360
  %70 = vst.msk [vmem:[%s3] sm:$0xff] %vm69, %v68
  // Predicated region
  $region10: #{spatial_coordinates_expectation.1} parent=0 // pred_check
    _
  $region11: #{spatial_coordinates_expectation.1} parent=0 // pred_check_branch
    %72 = sbr.rel (0) target = $region13
  $region12: #{spatial_coordinates_expectation.1} parent=0 // pred_region
    _
  $region13: #{spatial_coordinates_expectation.1} parent=0 // pred_fallthru
    _
  // Predicated region
  $region14: #{spatial_coordinates_expectation.1} parent=0 // pred_check
    _
  $region15: #{spatial_coordinates_expectation.1} parent=0 // pred_check_branch
    %74 = sbr.rel (0) target = $region17
  $region16: #{spatial_coordinates_expectation.1} parent=0 // pred_region
    _
  $region17: #{spatial_coordinates_expectation.1} parent=0 // pred_fallthru
    _
  // Predicated region
  $region18: #{spatial_coordinates_expectation.1} parent=0 // pred_check
    _
  $region19: #{spatial_coordinates_expectation.1} parent=0 // pred_check_branch
    %76 = sbr.rel (0) target = $region21
  $region20: #{spatial_coordinates_expectation.1} parent=0 // pred_region
    _
  $region21: #{spatial_coordinates_expectation.1} parent=0 // pred_fallthru
    _
  // Predicated region
  $region22: #{spatial_coordinates_expectation.1} parent=0 // pred_check
    _
  $region23: #{spatial_coordinates_expectation.1} parent=0 // pred_check_branch
    %78 = sbr.rel (0) target = $region25
  $region24: #{spatial_coordinates_expectation.1} parent=0 // pred_region
    _
  $region25: #{spatial_coordinates_expectation.1} parent=0 // pred_fallthru
    _

</llo_original>
